<compile_context>
chip_gen: v6e
topology: v6e:2x2x1
jax: 0.10.0
libtpu: 0.0.40
codegen_flags: <defaults>
</compile_context>

<pallas_src>
import functools
import math

import jax
import jax.numpy as jnp
from jax.experimental import pallas as pl
from jax.experimental.pallas import tpu as pltpu


def _round_up(v, m):
    return (v + m - 1) // m * m


def _pad2d(a, shape):
    """Zero-pad a 2-D array up to `shape`; no-op (no copy) if already that shape."""
    if tuple(a.shape) == tuple(shape):
        return a
    return jnp.pad(a, [(0, t - s) for s, t in zip(a.shape, shape)])


def _fc_lora_kernel(x_ref, wT_ref, b_ref, xa_ref, lbT_ref, o_ref, *scratch,
                    weight_gain, bias_gain, scaling):
    k = pl.program_id(2)
    nk = pl.num_programs(2)

    # f32 output: accumulate straight into the output block (VMEM-resident across
    # k); otherwise use the f32 scratch accumulator.
    acc_ref = scratch[0] if scratch else o_ref

    @pl.when(k == 0)
    def _():
        acc_ref[...] = jnp.zeros_like(acc_ref)

    # Base matmul: canonical (tm, tk) @ (tk, tn) on the MXU, f32 accumulation.
    acc_ref[...] += jnp.dot(x_ref[...], wT_ref[...],
                            preferred_element_type=jnp.float32)

    @pl.when(k == nk - 1)
    def _():
        # LoRA second matmul (rank padded to 128 lanes), once per output tile.
        lora = jnp.dot(xa_ref[...], lbT_ref[...],
                       preferred_element_type=jnp.float32)
        out = (acc_ref[...] * weight_gain
               + b_ref[...].astype(jnp.float32) * bias_gain
               + lora * scaling)
        o_ref[...] = out.astype(o_ref.dtype)


def fc_lora_forward(x, weight, bias, lora_A, lora_B, *,
                    lr_multiplier=1.0, lora_alpha=1,
                    tm=256, tn=512, tk=1024,
                    compute_dtype=jnp.bfloat16):
    N, K = x.shape
    O = weight.shape[0]
    r = lora_A.shape[0]
    out_dtype = x.dtype

    weight_gain = float(lr_multiplier) / math.sqrt(K)
    bias_gain = float(lr_multiplier)
    scaling = float(lora_alpha) / float(r)

    # TODO(synk): lora_dropout > 0 (training-mode nn.Dropout) and activation !=
    # 'linear' (bias_act path) are not implemented; module defaults are reproduced.

    # LoRA first matmul hoisted out of the kernel: its rank-r output is lane-sparse
    # and would otherwise force a cross-j scratch (blocking j-parallelism on v7x).
    xa = jnp.dot(x, lora_A.T, preferred_element_type=jnp.float32)

    # ---- tile selection ------------------------------------------------------
    # Small-N fast path: single i tile; tk covers all of K when it fits so the K
    # grid (and the init/finalize `pl.when`s) collapse to one step.
    tm = min(tm, _round_up(N, 16))
    tn = min(tn, _round_up(O, 128))
    tk = min(tk, _round_up(K, 128))
    Np, Op, Kp = _round_up(N, tm), _round_up(O, tn), _round_up(K, tk)
    r_pad = _round_up(r, 128)   # lane-dense LoRA rank

    # ---- operand prep (bf16 MXU-native; pads skipped when already aligned) ----
    xp = _pad2d(x.astype(compute_dtype), (Np, Kp))
    wTp = _pad2d(weight.T.astype(compute_dtype), (Kp, Op))        # canonical (K, O)
    bp = _pad2d(bias.astype(jnp.float32).reshape(1, O), (1, Op))
    xap = _pad2d(xa.astype(compute_dtype), (Np, r_pad))
    lbTp = _pad2d(lora_B.T.astype(compute_dtype), (r_pad, Op))

    grid = (Np // tm, Op // tn, Kp // tk)

    use_acc_scratch = jnp.dtype(out_dtype) != jnp.dtype(jnp.float32)
    scratch_shapes = ([pltpu.VMEM((tm, tn), jnp.float32)]
                      if use_acc_scratch else [])

    in_bytes = jnp.dtype(compute_dtype).itemsize
    out_bytes = jnp.dtype(out_dtype).itemsize
    # Double-buffered working-set estimate (+ scratch); keep under v7x's 64 MiB.
    est = (2 * (tm * tk + tk * tn + tm * r_pad + r_pad * tn) * in_bytes
           + 2 * tn * 4 + 2 * tm * tn * out_bytes
           + (tm * tn * 4 if use_acc_scratch else 0))
    vmem_limit = int(min(48 * 2**20, max(32 * 2**20, 2 * est)))

    kernel = functools.partial(
        _fc_lora_kernel,
        weight_gain=weight_gain, bias_gain=bias_gain, scaling=scaling)

    out = pl.pallas_call(
        kernel,
        out_shape=jax.ShapeDtypeStruct((Np, Op), out_dtype),
        grid_spec=pltpu.PrefetchScalarGridSpec(
            num_scalar_prefetch=0,
            grid=grid,
            in_specs=[
                pl.BlockSpec((tm, tk), lambda i, j, k: (i, k)),      # x
                # NOTE: if profiling shows exposed weight DMA at large tn on v7x,
                # add pipeline_mode=pl.Buffered(3) here and sweep.
                pl.BlockSpec((tk, tn), lambda i, j, k: (k, j)),      # weight.T
                pl.BlockSpec((1, tn), lambda i, j, k: (0, j)),       # bias [1, O]
                pl.BlockSpec((tm, r_pad), lambda i, j, k: (i, 0)),   # x @ lora_A.T
                pl.BlockSpec((r_pad, tn), lambda i, j, k: (0, j)),   # lora_B.T
            ],
            out_specs=pl.BlockSpec((tm, tn), lambda i, j, k: (i, j)),
            scratch_shapes=scratch_shapes),
        compiler_params=pltpu.CompilerParams(
            # xa is hoisted, so i AND j tiles are independent -> both "parallel"
            # (shards across v7x megacore TensorCores); K is the reduction axis.
            dimension_semantics=("parallel", "parallel", "arbitrary"),
            vmem_limit_bytes=vmem_limit),
    )(xp, wTp, bp, xap, lbTp)

    return out[:N, :O]


def fc_lora_reference(x, weight, bias, lora_A, lora_B, *,
                      lr_multiplier=1.0, lora_alpha=1):
    x = x.astype(jnp.float32)
    K = x.shape[1]
    r = lora_A.shape[0]
    hi = jax.lax.Precision.HIGHEST
    w = weight.astype(jnp.float32) * (lr_multiplier / math.sqrt(K))
    b = bias.astype(jnp.float32) * lr_multiplier
    y = jnp.dot(x, w.T, precision=hi) + b[None, :]
    y = y + jnp.dot(jnp.dot(x, lora_A.T, precision=hi), lora_B.T,
                    precision=hi) * (lora_alpha / r)
    return y


if __name__ == "__main__":
    key = jax.random.PRNGKey(0)

    def run_case(name, N, in_features, out_features, r, lr_multiplier, lora_alpha,
                 x_dtype, tiles, case_key, rel_tol=2.5e-2):
        k_x, k_w, k_b, k_a, k_lb = jax.random.split(case_key, 5)
        x = jax.random.normal(k_x, (N, in_features),
                              dtype=jnp.float32).astype(x_dtype)
        weight = jax.random.normal(
            k_w, (out_features, in_features), dtype=jnp.float32) / lr_multiplier
        bias = jax.random.normal(k_b, (out_features,), dtype=jnp.float32)
        a_bound = 1.0 / math.sqrt(in_features)   # kaiming_uniform(a=sqrt(5)) bound
        lora_A = jax.random.uniform(k_a, (r, in_features), dtype=jnp.float32,
                                    minval=-a_bound, maxval=a_bound)
        # NOTE: the module zero-inits lora_B; use nonzero values here so the LoRA
        # path is actually exercised by the correctness check.
        lora_B = 0.1 * jax.random.normal(k_lb, (out_features, r), dtype=jnp.float32)

        out = fc_lora_forward(x, weight, bias, lora_A, lora_B,
                              lr_multiplier=lr_multiplier, lora_alpha=lora_alpha,
                              **tiles)
        out = jax.block_until_ready(out)
        ref = fc_lora_reference(x, weight, bias, lora_A, lora_B,
                                lr_multiplier=lr_multiplier, lora_alpha=lora_alpha)
        assert out.shape == (N, out_features), name
        assert out.dtype == x.dtype, name
        # Relative-to-scale tolerance accounts for bf16 operands + f32 MXU
        # accumulation vs the f32 HIGHEST-precision reference; structural bugs
        # produce O(1) relative errors.
        err = float(jnp.max(jnp.abs(out.astype(jnp.float32) - ref)))
        scale = float(jnp.max(jnp.abs(ref))) + 1e-12
        assert err <= rel_tol * scale, (
            f"case '{name}': rel err {err / scale:.3e} exceeds {rel_tol:.1e}")

    k1, k2, k3 = jax.random.split(key, 3)
    # Small mapping-network-like layer (lr_multiplier=0.01 as in StyleGAN2 mapping);
    # exercises the small-N fast path (grid=(1,1,1)) and f32 direct-accumulation.
    run_case("small", N=8, in_features=32, out_features=32, r=4,
             lr_multiplier=0.01, lora_alpha=1, x_dtype=jnp.float32,
             tiles={}, case_key=k1)
    # Multi-tile case: exercises the full (i, j, k) grid with K accumulation,
    # j-parallel output tiles and padding of a non-aligned out_features.
    run_case("tiled", N=32, in_features=256, out_features=160, r=4,
             lr_multiplier=1.0, lora_alpha=2, x_dtype=jnp.float32,
             tiles=dict(tm=16, tn=128, tk=128), case_key=k2)
    # bf16 activations: exercises the f32 scratch-accumulator (non-f32 output) path.
    run_case("bf16", N=16, in_features=128, out_features=128, r=8,
             lr_multiplier=1.0, lora_alpha=4, x_dtype=jnp.bfloat16,
             tiles={}, case_key=k3)

    print("KERNEL_OK")
</pallas_src>

<mosaic_0001>
module attributes {stable_mosaic.version = 11 : i64} {
  func.func @_fc_lora_kernel(%arg0: i32, %arg1: i32, %arg2: i32, %arg3: memref<16x128xbf16, #tpu.memory_space<vmem>>, %arg4: memref<128x128xbf16, #tpu.memory_space<vmem>>, %arg5: memref<1x128xf32, #tpu.memory_space<vmem>>, %arg6: memref<16x128xbf16, #tpu.memory_space<vmem>>, %arg7: memref<128x128xbf16, #tpu.memory_space<vmem>>, %arg8: memref<16x128xf32, #tpu.memory_space<vmem>>) attributes {dimension_semantics = [#tpu.dimension_semantics<parallel>, #tpu.dimension_semantics<parallel>, #tpu.dimension_semantics<arbitrary>], iteration_bounds = array<i64: 1, 1, 1>, scalar_prefetch = 0 : i64, scratch_operands = 0 : i64, tpu.core_type = #tpu.core_type<tc>, window_params = [{transform_indices = @transform_0, window_bounds = array<i64: 16, 128>}, {transform_indices = @transform_1, window_bounds = array<i64: 128, 128>}, {transform_indices = @transform_2, window_bounds = array<i64: 1, 128>}, {transform_indices = @transform_3, window_bounds = array<i64: 16, 128>}, {transform_indices = @transform_4, window_bounds = array<i64: 128, 128>}, {transform_indices = @transform_5, window_bounds = array<i64: 16, 128>}]} {
    %c0_i32 = arith.constant 0 : i32
    %0 = arith.cmpi eq, %arg2, %c0_i32 : i32
    %1 = arith.extui %0 : i1 to i32
    %c0_i32_0 = arith.constant 0 : i32
    %2 = arith.cmpi ne, %1, %c0_i32_0 : i32
    scf.if %2 {
      %cst_10 = arith.constant 0.000000e+00 : f32
      %12 = vector.broadcast %cst_10 : f32 to vector<16x128xf32>
      %c0_11 = arith.constant 0 : index
      %c0_12 = arith.constant 0 : index
      %13 = vector.load %arg8[%c0_11, %c0_12] : memref<16x128xf32, #tpu.memory_space<vmem>>, vector<16x128xf32>
      tpu.vector_store %arg8[%c0_11, %c0_12], %12 {strides = array<i32>} : memref<16x128xf32, #tpu.memory_space<vmem>>, vector<16x128xf32>,
    } else {
    }
    %c0 = arith.constant 0 : index
    %c0_1 = arith.constant 0 : index
    %3 = vector.load %arg8[%c0, %c0_1] : memref<16x128xf32, #tpu.memory_space<vmem>>, vector<16x128xf32>
    %c0_2 = arith.constant 0 : index
    %c0_3 = arith.constant 0 : index
    %4 = vector.load %arg3[%c0_2, %c0_3] : memref<16x128xbf16, #tpu.memory_space<vmem>>, vector<16x128xbf16>
    %c0_4 = arith.constant 0 : index
    %c0_5 = arith.constant 0 : index
    %5 = vector.load %arg4[%c0_4, %c0_5] : memref<128x128xbf16, #tpu.memory_space<vmem>>, vector<128x128xbf16>
    %cst = arith.constant dense<0.000000e+00> : vector<16x128xf32>
    %6 = tpu.matmul %4, %5, %cst {dimension_numbers = #tpu.dot_dimension_numbers<[1], [0], [0], [1], [0, 0, 1, 1], [], []>} : vector<16x128xbf16>, vector<128x128xbf16>, vector<16x128xf32> -> vector<16x128xf32>
    %7 = arith.addf %3, %6 : vector<16x128xf32>
    %c0_6 = arith.constant 0 : index
    %c0_7 = arith.constant 0 : index
    %8 = vector.load %arg8[%c0_6, %c0_7] : memref<16x128xf32, #tpu.memory_space<vmem>>, vector<16x128xf32>
    tpu.vector_store %arg8[%c0_6, %c0_7], %7 {strides = array<i32>} : memref<16x128xf32, #tpu.memory_space<vmem>>, vector<16x128xf32>,
    %c0_i32_8 = arith.constant 0 : i32
    %9 = arith.cmpi eq, %arg2, %c0_i32_8 : i32
    %10 = arith.extui %9 : i1 to i32
    %c0_i32_9 = arith.constant 0 : i32
    %11 = arith.cmpi ne, %10, %c0_i32_9 : i32
    scf.if %11 {
      %c0_10 = arith.constant 0 : index
      %c0_11 = arith.constant 0 : index
      %12 = vector.load %arg6[%c0_10, %c0_11] : memref<16x128xbf16, #tpu.memory_space<vmem>>, vector<16x128xbf16>
      %c0_12 = arith.constant 0 : index
      %c0_13 = arith.constant 0 : index
      %13 = vector.load %arg7[%c0_12, %c0_13] : memref<128x128xbf16, #tpu.memory_space<vmem>>, vector<128x128xbf16>
      %cst_14 = arith.constant dense<0.000000e+00> : vector<16x128xf32>
      %14 = tpu.matmul %12, %13, %cst_14 {dimension_numbers = #tpu.dot_dimension_numbers<[1], [0], [0], [1], [0, 0, 1, 1], [], []>} : vector<16x128xbf16>, vector<128x128xbf16>, vector<16x128xf32> -> vector<16x128xf32>
      %c0_15 = arith.constant 0 : index
      %c0_16 = arith.constant 0 : index
      %15 = vector.load %arg8[%c0_15, %c0_16] : memref<16x128xf32, #tpu.memory_space<vmem>>, vector<16x128xf32>
      %cst_17 = arith.constant 0.00176776689 : f32
      %16 = vector.broadcast %cst_17 : f32 to vector<16x128xf32>
      %17 = arith.mulf %15, %16 : vector<16x128xf32>
      %c0_18 = arith.constant 0 : index
      %c0_19 = arith.constant 0 : index
      %18 = vector.load %arg5[%c0_18, %c0_19] : memref<1x128xf32, #tpu.memory_space<vmem>>, vector<1x128xf32>
      %cst_20 = arith.constant 0.00999999977 : f32
      %19 = vector.broadcast %cst_20 : f32 to vector<1x128xf32>
      %20 = arith.mulf %18, %19 : vector<1x128xf32>
      %21 = vector.broadcast %20 : vector<1x128xf32> to vector<16x128xf32>
      %22 = arith.addf %17, %21 : vector<16x128xf32>
      %cst_21 = arith.constant 2.500000e-01 : f32
      %23 = vector.broadcast %cst_21 : f32 to vector<16x128xf32>
      %24 = arith.mulf %14, %23 : vector<16x128xf32>
      %25 = arith.addf %22, %24 : vector<16x128xf32>
      %c0_22 = arith.constant 0 : index
      %c0_23 = arith.constant 0 : index
      %26 = vector.load %arg8[%c0_22, %c0_23] : memref<16x128xf32, #tpu.memory_space<vmem>>, vector<16x128xf32>
      tpu.vector_store %arg8[%c0_22, %c0_23], %25 {strides = array<i32>} : memref<16x128xf32, #tpu.memory_space<vmem>>, vector<16x128xf32>,
    } else {
    }
    return
  }
  func.func @transform_0(%arg0: i32, %arg1: i32, %arg2: i32) -> (i32, i32) {
    %c0_i32 = arith.constant 0 : i32
    return %arg0, %arg2 : i32, i32
  }
  func.func @transform_1(%arg0: i32, %arg1: i32, %arg2: i32) -> (i32, i32) {
    %c0_i32 = arith.constant 0 : i32
    return %arg2, %arg1 : i32, i32
  }
  func.func @transform_2(%arg0: i32, %arg1: i32, %arg2: i32) -> (i32, i32) {
    %c0_i32 = arith.constant 0 : i32
    %c0_i32_0 = arith.constant 0 : i32
    return %c0_i32, %arg1 : i32, i32
  }
  func.func @transform_3(%arg0: i32, %arg1: i32, %arg2: i32) -> (i32, i32) {
    %c0_i32 = arith.constant 0 : i32
    %c0_i32_0 = arith.constant 0 : i32
    return %arg0, %c0_i32 : i32, i32
  }
  func.func @transform_4(%arg0: i32, %arg1: i32, %arg2: i32) -> (i32, i32) {
    %c0_i32 = arith.constant 0 : i32
    %c0_i32_0 = arith.constant 0 : i32
    return %c0_i32, %arg1 : i32, i32
  }
  func.func @transform_5(%arg0: i32, %arg1: i32, %arg2: i32) -> (i32, i32) {
    %c0_i32 = arith.constant 0 : i32
    return %arg0, %arg1 : i32, i32
  }
}

</mosaic_0001>

<llo_original>
// kernel: tpu_custom_call.1
$region0: #{tpu_custom_call.1}
  #allocation0 [shape = 'u32[]', space=smem, size = 0x4, offset = 0x4, fixed_abs, tag = 'smem constant byte address 0x4 - core index']
  #allocation1 [shape = 'u32[144,128]{1,0:T(1,128)}', space=vmem, size = 0x12000, scoped, tag = 'internal scratch']
  %s0 = inlined_call_operand.hbm [shape: bf16[16,128], index: 0, kind: input, shape index: {}]
  %s1 = inlined_call_operand.hbm [shape: bf16[128,128], index: 1, kind: input, shape index: {}]
  %s2 = inlined_call_operand.vmem [shape: f32[1,128], index: 2, kind: input, shape index: {}]
  %s3 = inlined_call_operand.hbm [shape: bf16[16,128], index: 3, kind: input, shape index: {}]
  %s4 = inlined_call_operand.hbm [shape: bf16[128,128], index: 4, kind: input, shape index: {}]
  %s5 = inlined_call_operand.hbm [shape: f32[16,128], index: 5, kind: output, shape index: {}]
  %s6 = sld [smem:[#allocation0]]
  $region54: #{tpu_custom_call.1} parent=0
    _
  %s8 = ssub.s32 1, %s6
  %s9 = scalar_select 0, %s8, %s6
  $region1: #{tpu_custom_call.1} parent=0
    #allocation2 [shape = 'u8[4096]{0}', space=vmem, size = 0x1000, scoped, tag = 'input window, operand 0, single buffered']
    #allocation3 [shape = 's32[1]{0}', space=sflag, size = 0x4, scoped, tag = 'scoped memory for tpu_custom_call.1']
    #allocation4 [shape = 's32[1]{0}', space=sflag, size = 0x4, scoped, tag = 'scoped memory for tpu_custom_call.1']
    #allocation5 [shape = 'u8[32768]{0}', space=vmem, size = 0x8000, scoped, tag = 'input window, operand 1, single buffered']
    #allocation6 [shape = 's32[1]{0}', space=sflag, size = 0x4, scoped, tag = 'scoped memory for tpu_custom_call.1']
    #allocation7 [shape = 'u8[4096]{0}', space=vmem, size = 0x1000, scoped, tag = 'input window, operand 3, single buffered']
    #allocation8 [shape = 'u8[32768]{0}', space=vmem, size = 0x8000, scoped, tag = 'input window, operand 4, single buffered']
    #allocation9 [shape = 's32[1]{0}', space=sflag, size = 0x4, scoped, tag = 'scoped memory for tpu_custom_call.1']
    #allocation10 [shape = 'u8[8192]{0}', space=vmem, size = 0x2000, scoped, tag = 'output window, operand 0, single buffered']
    %10 = vsyncpa [#allocation3], 0
    %11 = vsyncpa [#allocation6], 0
    %12 = vsyncpa [#allocation9], 0
    %13 = vsyncpa [#allocation4], 0
    // Predicated region
    $region2: #{tpu_custom_call.1} parent=1 // pred_check
      _
    $region3: #{tpu_custom_call.1} parent=1 // pred_check_branch
      %15 = sbr.rel (0) target = $region5
    $region4: #{tpu_custom_call.1} parent=1 // pred_region
      %s17 = ssub.s32 128, 128
      %18 = vsyncadd [#allocation3], %s17
      %s19 = sshll.u32 [#allocation2], 4
      %s20 = int_to_ptr.vmem [resolvable:$true] %s19
      %25 = dma.hbm_to_vmem [thread:$0]  %s0, 128, %s20, [#allocation3], 64, 64, 4
    $region5: #{tpu_custom_call.1} parent=1 // pred_fallthru
      _
    // Predicated region
    $region6: #{tpu_custom_call.1} parent=1 // pred_check
      _
    $region7: #{tpu_custom_call.1} parent=1 // pred_check_branch
      %27 = sbr.rel (0) target = $region9
    $region8: #{tpu_custom_call.1} parent=1 // pred_region
      %s29 = ssub.s32 1024, 1024
      %30 = vsyncadd [#allocation6], %s29
      %s31 = sshll.u32 [#allocation5], 4
      %s32 = int_to_ptr.vmem [resolvable:$true] %s31
      %37 = dma.hbm_to_vmem [thread:$0]  %s1, 1024, %s32, [#allocation6], 64, 64, 4
    $region9: #{tpu_custom_call.1} parent=1 // pred_fallthru
      _
    // Predicated region
    $region10: #{tpu_custom_call.1} parent=1 // pred_check
      _
    $region11: #{tpu_custom_call.1} parent=1 // pred_check_branch
      %39 = sbr.rel (0) target = $region13
    $region12: #{tpu_custom_call.1} parent=1 // pred_region
      _
    $region13: #{tpu_custom_call.1} parent=1 // pred_fallthru
      _
    // Predicated region
    $region14: #{tpu_custom_call.1} parent=1 // pred_check
      _
    $region15: #{tpu_custom_call.1} parent=1 // pred_check_branch
      %41 = sbr.rel (0) target = $region17
    $region16: #{tpu_custom_call.1} parent=1 // pred_region
      %s43 = ssub.s32 128, 128
      %44 = vsyncadd [#allocation6], %s43
      %s45 = sshll.u32 [#allocation7], 4
      %s46 = int_to_ptr.vmem [resolvable:$true] %s45
      %51 = dma.hbm_to_vmem [thread:$0]  %s3, 128, %s46, [#allocation6], 64, 64, 4
    $region17: #{tpu_custom_call.1} parent=1 // pred_fallthru
      _
    // Predicated region
    $region18: #{tpu_custom_call.1} parent=1 // pred_check
      _
    $region19: #{tpu_custom_call.1} parent=1 // pred_check_branch
      %53 = sbr.rel (0) target = $region21
    $region20: #{tpu_custom_call.1} parent=1 // pred_region
      %s55 = ssub.s32 1024, 1024
      %56 = vsyncadd [#allocation9], %s55
      %s57 = sshll.u32 [#allocation8], 4
      %s58 = int_to_ptr.vmem [resolvable:$true] %s57
      %63 = dma.hbm_to_vmem [thread:$0]  %s4, 1024, %s58, [#allocation9], 64, 64, 4
    $region21: #{tpu_custom_call.1} parent=1 // pred_fallthru
      _
    // Predicated region
    $region22: #{tpu_custom_call.1} parent=1 // pred_check
      _
    $region23: #{tpu_custom_call.1} parent=1 // pred_check_branch
      %65 = sbr.rel (0) target = $region25
    $region24: #{tpu_custom_call.1} parent=1 // pred_region
      %66 = dma.done [#allocation3], 128
    $region25: #{tpu_custom_call.1} parent=1 // pred_fallthru
      _
    // Predicated region
    $region26: #{tpu_custom_call.1} parent=1 // pred_check
      _
    $region27: #{tpu_custom_call.1} parent=1 // pred_check_branch
      %68 = sbr.rel (0) target = $region29
    $region28: #{tpu_custom_call.1} parent=1 // pred_region
      %69 = dma.done [#allocation6], 1024
    $region29: #{tpu_custom_call.1} parent=1 // pred_fallthru
      _
    // Predicated region
    $region30: #{tpu_custom_call.1} parent=1 // pred_check
      _
    $region31: #{tpu_custom_call.1} parent=1 // pred_check_branch
      %71 = sbr.rel (0) target = $region33
    $region32: #{tpu_custom_call.1} parent=1 // pred_region
      %72 = dma.done [#allocation6], 128
    $region33: #{tpu_custom_call.1} parent=1 // pred_fallthru
      _
    // Predicated region
    $region34: #{tpu_custom_call.1} parent=1 // pred_check
      _
    $region35: #{tpu_custom_call.1} parent=1 // pred_check_branch
      %74 = sbr.rel (0) target = $region37
    $region36: #{tpu_custom_call.1} parent=1 // pred_region
      %75 = dma.done [#allocation9], 1024
    $region37: #{tpu_custom_call.1} parent=1 // pred_fallthru
      _
    %p77 = scmp.eq.s32.totalorder 0, 0
    // Predicated region
    $region38: #{tpu_custom_call.1} parent=1 // pred_check
      %p78 = pneg %p77
    $region39: #{tpu_custom_call.1} parent=1 // pred_check_branch
      %80 = sbr.rel (%p78) target = $region41
    $region40: #{tpu_custom_call.1} parent=1 // pred_region
      %81 = vst [vmem:[#allocation10] sm:$0xff] 0.0
      %82 = vst [vmem:[#allocation10 + $0x8] sm:$0xff] 0.0
    $region41: #{tpu_custom_call.1} parent=1 // pred_fallthru
      _
    %v83 = vld [vmem:[#allocation10] sm:$0xff]
    %v84 = vld [vmem:[#allocation10 + $0x8] sm:$0xff]
    %v85 = vld [vmem:[#allocation2] sm:$0xf]
    %v86 = vld [vmem:[#allocation2 + $0x4] sm:$0xf]
    %v87 = vld [vmem:[#allocation5] sm:$0xf]
    %v88 = vld [vmem:[#allocation5 + $0x4] sm:$0xf]
    %v89 = vld [vmem:[#allocation5 + $0x8] sm:$0xf]
    %v90 = vld [vmem:[#allocation5 + $0xc] sm:$0xf]
    %v91 = vld [vmem:[#allocation5 + $0x10] sm:$0xf]
    %v92 = vld [vmem:[#allocation5 + $0x14] sm:$0xf]
    %v93 = vld [vmem:[#allocation5 + $0x18] sm:$0xf]
    %v94 = vld [vmem:[#allocation5 + $0x1c] sm:$0xf]
    %v95 = vld [vmem:[#allocation5 + $0x20] sm:$0xf]
    %v96 = vld [vmem:[#allocation5 + $0x24] sm:$0xf]
    %v97 = vld [vmem:[#allocation5 + $0x28] sm:$0xf]
    %v98 = vld [vmem:[#allocation5 + $0x2c] sm:$0xf]
    %v99 = vld [vmem:[#allocation5 + $0x30] sm:$0xf]
    %v100 = vld [vmem:[#allocation5 + $0x34] sm:$0xf]
    %v101 = vld [vmem:[#allocation5 + $0x38] sm:$0xf]
    %v102 = vld [vmem:[#allocation5 + $0x3c] sm:$0xf]
    %v105 = vunpack.c.l.b16 %v85
    %v106 = vunpack.c.l.b16 %v86
    %v107 = vpack.c.b16 %v106, %v105
    %v125 = vunpack.c.l.b16 %v87
    %v126 = vunpack.c.l.b16 %v88
    %v127 = vunpack.c.l.b16 %v89
    %v128 = vunpack.c.l.b16 %v90
    %v129 = vunpack.c.l.b16 %v91
    %v130 = vunpack.c.l.b16 %v92
    %v131 = vunpack.c.l.b16 %v93
    %v132 = vunpack.c.l.b16 %v94
    %v133 = vunpack.c.l.b16 %v95
    %v134 = vunpack.c.l.b16 %v96
    %v135 = vunpack.c.l.b16 %v97
    %v136 = vunpack.c.l.b16 %v98
    %v137 = vunpack.c.l.b16 %v99
    %v138 = vunpack.c.l.b16 %v100
    %v139 = vunpack.c.l.b16 %v101
    %v140 = vunpack.c.l.b16 %v102
    %v141 = vpack.c.b16 %v126, %v125
    %v142 = vpack.c.b16 %v128, %v127
    %v143 = vpack.c.b16 %v130, %v129
    %v144 = vpack.c.b16 %v132, %v131
    %v145 = vpack.c.b16 %v134, %v133
    %v146 = vpack.c.b16 %v136, %v135
    %v147 = vpack.c.b16 %v138, %v137
    %v148 = vpack.c.b16 %v140, %v139
    %157 = vmatprep.subr.bf16.mxu0 0
    %158 = vmatpush1.bf16.msra.mxu0 %v148
    %159 = vmatprep.subr.bf16.mxu0 0
    %160 = vmatpush1.bf16.msra.mxu0 %v147
    %161 = vmatprep.subr.bf16.mxu0 0
    %162 = vmatpush1.bf16.msra.mxu0 %v146
    %163 = vmatprep.subr.bf16.mxu0 0
    %164 = vmatpush1.bf16.msra.mxu0 %v145
    %165 = vmatprep.subr.bf16.mxu0 0
    %166 = vmatpush1.bf16.msra.mxu0 %v144
    %167 = vmatprep.subr.bf16.mxu0 0
    %168 = vmatpush1.bf16.msra.mxu0 %v143
    %169 = vmatprep.subr.bf16.mxu0 0
    %170 = vmatpush1.bf16.msra.mxu0 %v142
    %171 = vmatprep.subr.bf16.mxu0 0
    %172 = vmatpush1.bf16.msra.mxu0 %v141
    %173 = vmatprep.subr.bf16.mxu0 0
    %174 = vmatpush2.bf16.msra.mxu0 0
    %175 = vmatprep.subr.bf16.mxu0 0
    %176 = vmatpush2.bf16.msra.mxu0 0
    %177 = vmatprep.subr.bf16.mxu0 0
    %178 = vmatpush2.bf16.msra.mxu0 0
    %179 = vmatprep.subr.bf16.mxu0 0
    %180 = vmatpush2.bf16.msra.mxu0 0
    %181 = vmatprep.subr.bf16.mxu0 0
    %182 = vmatpush2.bf16.msra.mxu0 0
    %183 = vmatprep.subr.bf16.mxu0 0
    %184 = vmatpush2.bf16.msra.mxu0 0
    %185 = vmatprep.subr.bf16.mxu0 0
    %186 = vmatpush2.bf16.msra.mxu0 0
    %187 = vmatprep.subr.bf16.mxu0 0
    %188 = vmatpush2.bf16.msra.mxu0 0
    %189 = vmatprep.mubr.bf16.mxu0 0
    %190 = vmatmul.mubr.bf16.gmra.mxu0 %v107
    %v191 = vpop.f32.mrf.mxu0
    %v192 = vadd.f32 0.0, %v191
    %v193 = vpop.f32.mrf.mxu0
    %v194 = vpop.f32.mrf.mxu0
    %v195 = vadd.f32 0.0, %v194
    %v196 = vpop.f32.mrf.mxu0
    %197 = vdwg.mxu0
    %v198 = vadd.f32 %v83, %v192
    %v199 = vadd.f32 %v84, %v195
    %200 = vst [vmem:[#allocation10] sm:$0xff] %v198
    %201 = vst [vmem:[#allocation10 + $0x8] sm:$0xff] %v199
    // Predicated region
    $region42: #{tpu_custom_call.1} parent=1 // pred_check
      %p202 = pneg %p77
    $region43: #{tpu_custom_call.1} parent=1 // pred_check_branch
      %204 = sbr.rel (%p202) target = $region45
    $region44: #{tpu_custom_call.1} parent=1 // pred_region
      %v205 = vld [vmem:[#allocation7] sm:$0xf]
      %v206 = vld [vmem:[#allocation7 + $0x4] sm:$0xf]
      %v207 = vld [vmem:[#allocation8] sm:$0xf]
      %v208 = vld [vmem:[#allocation8 + $0x4] sm:$0xf]
      %v209 = vld [vmem:[#allocation8 + $0x8] sm:$0xf]
      %v210 = vld [vmem:[#allocation8 + $0xc] sm:$0xf]
      %v211 = vld [vmem:[#allocation8 + $0x10] sm:$0xf]
      %v212 = vld [vmem:[#allocation8 + $0x14] sm:$0xf]
      %v213 = vld [vmem:[#allocation8 + $0x18] sm:$0xf]
      %v214 = vld [vmem:[#allocation8 + $0x1c] sm:$0xf]
      %v215 = vld [vmem:[#allocation8 + $0x20] sm:$0xf]
      %v216 = vld [vmem:[#allocation8 + $0x24] sm:$0xf]
      %v217 = vld [vmem:[#allocation8 + $0x28] sm:$0xf]
      %v218 = vld [vmem:[#allocation8 + $0x2c] sm:$0xf]
      %v219 = vld [vmem:[#allocation8 + $0x30] sm:$0xf]
      %v220 = vld [vmem:[#allocation8 + $0x34] sm:$0xf]
      %v221 = vld [vmem:[#allocation8 + $0x38] sm:$0xf]
      %v222 = vld [vmem:[#allocation8 + $0x3c] sm:$0xf]
      %v225 = vunpack.c.l.b16 %v205
      %v226 = vunpack.c.l.b16 %v206
      %v227 = vpack.c.b16 %v226, %v225
      %v245 = vunpack.c.l.b16 %v207
      %v246 = vunpack.c.l.b16 %v208
      %v247 = vunpack.c.l.b16 %v209
      %v248 = vunpack.c.l.b16 %v210
      %v249 = vunpack.c.l.b16 %v211
      %v250 = vunpack.c.l.b16 %v212
      %v251 = vunpack.c.l.b16 %v213
      %v252 = vunpack.c.l.b16 %v214
      %v253 = vunpack.c.l.b16 %v215
      %v254 = vunpack.c.l.b16 %v216
      %v255 = vunpack.c.l.b16 %v217
      %v256 = vunpack.c.l.b16 %v218
      %v257 = vunpack.c.l.b16 %v219
      %v258 = vunpack.c.l.b16 %v220
      %v259 = vunpack.c.l.b16 %v221
      %v260 = vunpack.c.l.b16 %v222
      %v261 = vpack.c.b16 %v246, %v245
      %v262 = vpack.c.b16 %v248, %v247
      %v263 = vpack.c.b16 %v250, %v249
      %v264 = vpack.c.b16 %v252, %v251
      %v265 = vpack.c.b16 %v254, %v253
      %v266 = vpack.c.b16 %v256, %v255
      %v267 = vpack.c.b16 %v258, %v257
      %v268 = vpack.c.b16 %v260, %v259
      %277 = vmatprep.subr.bf16.mxu0 0
      %278 = vmatpush1.bf16.msra.mxu0 %v268
      %279 = vmatprep.subr.bf16.mxu0 0
      %280 = vmatpush1.bf16.msra.mxu0 %v267
      %281 = vmatprep.subr.bf16.mxu0 0
      %282 = vmatpush1.bf16.msra.mxu0 %v266
      %283 = vmatprep.subr.bf16.mxu0 0
      %284 = vmatpush1.bf16.msra.mxu0 %v265
      %285 = vmatprep.subr.bf16.mxu0 0
      %286 = vmatpush1.bf16.msra.mxu0 %v264
      %287 = vmatprep.subr.bf16.mxu0 0
      %288 = vmatpush1.bf16.msra.mxu0 %v263
      %289 = vmatprep.subr.bf16.mxu0 0
      %290 = vmatpush1.bf16.msra.mxu0 %v262
      %291 = vmatprep.subr.bf16.mxu0 0
      %292 = vmatpush1.bf16.msra.mxu0 %v261
      %293 = vmatprep.subr.bf16.mxu0 0
      %294 = vmatpush2.bf16.msra.mxu0 0
      %295 = vmatprep.subr.bf16.mxu0 0
      %296 = vmatpush2.bf16.msra.mxu0 0
      %297 = vmatprep.subr.bf16.mxu0 0
      %298 = vmatpush2.bf16.msra.mxu0 0
      %299 = vmatprep.subr.bf16.mxu0 0
      %300 = vmatpush2.bf16.msra.mxu0 0
      %301 = vmatprep.subr.bf16.mxu0 0
      %302 = vmatpush2.bf16.msra.mxu0 0
      %303 = vmatprep.subr.bf16.mxu0 0
      %304 = vmatpush2.bf16.msra.mxu0 0
      %305 = vmatprep.subr.bf16.mxu0 0
      %306 = vmatpush2.bf16.msra.mxu0 0
      %307 = vmatprep.subr.bf16.mxu0 0
      %308 = vmatpush2.bf16.msra.mxu0 0
      %309 = vmatprep.mubr.bf16.mxu0 0
      %310 = vmatmul.mubr.bf16.gmra.mxu0 %v227
      %v311 = vpop.f32.mrf.mxu0
      %v312 = vadd.f32 0.0, %v311
      %v313 = vpop.f32.mrf.mxu0
      %v314 = vpop.f32.mrf.mxu0
      %v315 = vadd.f32 0.0, %v314
      %v316 = vpop.f32.mrf.mxu0
      %317 = vdwg.mxu0
      %v318 = vld [vmem:[#allocation10] sm:$0xff]
      %v319 = vld [vmem:[#allocation10 + $0x8] sm:$0xff]
      %v320 = vmul.f32 %v318, 0.0017677669
      %v321 = vmul.f32 %v319, 0.0017677669
      %v322 = vld [vmem:[%s2] sm:$0x1]
      %v323 = vmul.f32 %v322, 0.01
      %v325 = vlaneseq
      %v326 = vshrl.u32 %v325, 7
      %v327 = vsub.s32 0, %v326
      %v328 = vrot.slane %v323, %v327
      %v330 = vadd.f32 %v320, %v328
      %v331 = vadd.f32 %v321, %v328
      %v332 = vmul.f32 %v312, 0.25
      %v333 = vmul.f32 %v315, 0.25
      %v334 = vadd.f32 %v330, %v332
      %v335 = vadd.f32 %v331, %v333
      %336 = vst [vmem:[#allocation10] sm:$0xff] %v334
      %337 = vst [vmem:[#allocation10 + $0x8] sm:$0xff] %v335
    $region45: #{tpu_custom_call.1} parent=1 // pred_fallthru
      _
    // Predicated region
    $region46: #{tpu_custom_call.1} parent=1 // pred_check
      _
    $region47: #{tpu_custom_call.1} parent=1 // pred_check_branch
      %339 = sbr.rel (0) target = $region49
    $region48: #{tpu_custom_call.1} parent=1 // pred_region
      %s341 = ssub.s32 256, 256
      %342 = vsyncadd [#allocation4], %s341
      %s343 = sshll.u32 [#allocation10], 4
      %s344 = int_to_ptr.vmem [resolvable:$true] %s343
      %349 = dma.vmem_to_hbm [thread:$0]  %s344, 256, %s5, [#allocation4], 128, 128, 8
    $region49: #{tpu_custom_call.1} parent=1 // pred_fallthru
      _
    // Predicated region
    $region50: #{tpu_custom_call.1} parent=1 // pred_check
      _
    $region51: #{tpu_custom_call.1} parent=1 // pred_check_branch
      %351 = sbr.rel (0) target = $region53
    $region52: #{tpu_custom_call.1} parent=1 // pred_region
      %352 = dma.done [#allocation4], 256
    $region53: #{tpu_custom_call.1} parent=1 // pred_fallthru
      _
    %353 = vsyncpa [#allocation3], 1
    %354 = vsyncpa [#allocation6], 1
    %355 = vsyncpa [#allocation9], 1
    %356 = vsyncpa [#allocation4], 1

</llo_original>
